<compile_context>
chip_gen: v7x
topology: tpu7x:2x2x1
jax: 0.10.0
libtpu: 0.0.40
codegen_flags: <defaults>
</compile_context>

<pallas_src>
import math

import jax
import jax.numpy as jnp
from jax import lax
from jax.experimental import pallas as pl
from jax.experimental.pallas import tpu as pltpu


def attention_head_kernel(q_ref, k_ref, v_ref, mask_ref,
                          wq_ref, bq_ref, wk_ref, bk_ref, wv_ref, bv_ref,
                          o_ref):
    # Per grid step: one batch element.
    #   q/k/v : (1, S, E)        mask: (1, S, S) int32 (0 == masked out)
    #   wq/wk/wv : (E, D) bf16   (1/sqrt(D) already folded into wq/bq)
    #   bq/bk/bv : (1, D) f32    o : (1, S, D)
    q = q_ref[0].astype(jnp.bfloat16)
    k = k_ref[0].astype(jnp.bfloat16)
    v = v_ref[0].astype(jnp.bfloat16)

    # Projections: bf16 MXU operands, f32 accumulation, f32 bias add on the VPU.
    qh = jnp.dot(q, wq_ref[...], preferred_element_type=jnp.float32) + bq_ref[...]
    kh = jnp.dot(k, wk_ref[...], preferred_element_type=jnp.float32) + bk_ref[...]
    vh = jnp.dot(v, wv_ref[...], preferred_element_type=jnp.float32) + bv_ref[...]

    # scores = qh @ kh^T (scale pre-folded). Contract last dims (MXU trans_b
    # path) instead of materializing an explicit transpose.
    scores = lax.dot_general(
        qh.astype(jnp.bfloat16), kh.astype(jnp.bfloat16),
        dimension_numbers=(((1,), (1,)), ((), ())),
        preferred_element_type=jnp.float32)
    scores = jnp.where(mask_ref[0] == 0, -jnp.inf, scores)

    # Softmax in f32; reciprocal on the (otherwise idle) EUP slot.
    m = jnp.max(scores, axis=-1, keepdims=True)
    p = jnp.exp(scores - m)
    p = p * pl.reciprocal(jnp.sum(p, axis=-1, keepdims=True), approx=True)

    out = jnp.dot(p.astype(jnp.bfloat16), vh.astype(jnp.bfloat16),
                  preferred_element_type=jnp.float32)
    o_ref[0] = out.astype(o_ref.dtype)
    # TODO(synk): dropout on the attention probabilities (only taken when a
    # Dropout module is passed to scaled_dot_product_attetion) is not implemented.
    # TODO(synk): at realistic sequence lengths the (S,S) f32 score tile must be
    # replaced by a KV-tiled online-softmax (flash) formulation; irrelevant at S=8.


def attention_head(Q, K, V, mask, params):
    B, S, E = Q.shape
    wq, bq, wk, bk, wv, bv = params          # f32, (E, D) / (D,), x @ W + b layout
    D = wq.shape[1]

    # Fold the attention scale 1/sqrt(d_k) into the Q projection (in f32, before
    # the bf16 cast), then hand the MXU bf16 weight operands.
    scale = 1.0 / math.sqrt(D)
    wq_p = (wq * scale).astype(jnp.bfloat16)
    bq_p = (bq * scale).reshape(1, D).astype(jnp.float32)
    wk_p = wk.astype(jnp.bfloat16)
    bk_p = bk.reshape(1, D).astype(jnp.float32)
    wv_p = wv.astype(jnp.bfloat16)
    bv_p = bv.reshape(1, D).astype(jnp.float32)

    if mask is None:
        mask = jnp.ones((B, S, S), jnp.int32)   # mask=None path of the module
    mask = mask.astype(jnp.int32)

    rep = lambda shape: pl.BlockSpec(shape, lambda b: tuple(0 for _ in shape))

    return pl.pallas_call(
        attention_head_kernel,
        out_shape=jax.ShapeDtypeStruct((B, S, D), Q.dtype),
        grid_spec=pltpu.PrefetchScalarGridSpec(
            num_scalar_prefetch=0,
            grid=(B,),
            in_specs=[
                pl.BlockSpec((1, S, E), lambda b: (b, 0, 0)),   # Q
                pl.BlockSpec((1, S, E), lambda b: (b, 0, 0)),   # K
                pl.BlockSpec((1, S, E), lambda b: (b, 0, 0)),   # V
                pl.BlockSpec((1, S, S), lambda b: (b, 0, 0)),   # mask
                rep((E, D)), rep((1, D)),                       # Wq, bq (scaled)
                rep((E, D)), rep((1, D)),                       # Wk, bk
                rep((E, D)), rep((1, D)),                       # Wv, bv
            ],
            out_specs=pl.BlockSpec((1, S, D), lambda b: (b, 0, 0)),
        ),
        # "parallel" batch axis: lets v7x shard the two batch elements across
        # its two TensorCores; measured ~free on single-core v5e/v6e.
        compiler_params=pltpu.CompilerParams(
            dimension_semantics=("parallel",)),
    )(Q, K, V, mask, wq_p, bq_p, wk_p, bk_p, wv_p, bv_p)


def reference_attention_head(Q, K, V, mask, params):
    """Plain-JAX f32 reference reproducing the PyTorch forward."""
    wq, bq, wk, bk, wv, bv = params
    D = wq.shape[1]
    qh = Q @ wq + bq
    kh = K @ wk + bk
    vh = V @ wv + bv
    scores = jnp.einsum("bqd,bkd->bqk", qh, kh) / math.sqrt(D)
    if mask is not None:
        scores = jnp.where(mask == 0, -jnp.inf, scores)
    p = jax.nn.softmax(scores, axis=-1)
    return jnp.einsum("bqk,bkd->bqd", p, vh)


if __name__ == "__main__":
    # Small shapes consistent with the module: embedding_dim=32, head_dim=8.
    B, S, E, D = 2, 8, 32, 8

    key = jax.random.PRNGKey(0)
    keys = jax.random.split(key, 9)

    Q = jax.random.normal(keys[0], (B, S, E), jnp.float32)
    K = jax.random.normal(keys[1], (B, S, E), jnp.float32)
    V = jax.random.normal(keys[2], (B, S, E), jnp.float32)

    bound = 1.0 / math.sqrt(E)   # nn.Linear-style uniform init bound
    wq = jax.random.uniform(keys[3], (E, D), jnp.float32, -bound, bound)
    bq = jax.random.uniform(keys[4], (D,), jnp.float32, -bound, bound)
    wk = jax.random.uniform(keys[5], (E, D), jnp.float32, -bound, bound)
    bk = jax.random.uniform(keys[6], (D,), jnp.float32, -bound, bound)
    wv = jax.random.uniform(keys[7], (E, D), jnp.float32, -bound, bound)
    bv = jax.random.uniform(keys[8], (D,), jnp.float32, -bound, bound)
    params = (wq, bq, wk, bk, wv, bv)

    causal = jnp.tril(jnp.ones((S, S), jnp.int32))
    mask = jnp.tile(causal[None], (B, 1, 1))

    # Exercise both the masked and the mask=None paths of the forward.
    for m in (mask, None):
        out = jax.block_until_ready(attention_head(Q, K, V, m, params))
        ref = reference_attention_head(Q, K, V, m, params)
        assert out.shape == (B, S, D)
        # Tolerance relaxed for bf16 MXU operands + approx reciprocal.
        assert jnp.allclose(out, ref, atol=3e-2, rtol=3e-2), (
            f"max err {jnp.max(jnp.abs(out - ref))}")

    print("KERNEL_OK")
</pallas_src>

<mosaic_0001>
module attributes {stable_mosaic.version = 11 : i64} {
  func.func @attention_head_kernel(%arg0: i32, %arg1: memref<1x8x32xf32, #tpu.memory_space<vmem>>, %arg2: memref<1x8x32xf32, #tpu.memory_space<vmem>>, %arg3: memref<1x8x32xf32, #tpu.memory_space<vmem>>, %arg4: memref<1x8x8xi32, #tpu.memory_space<vmem>>, %arg5: memref<32x8xbf16, #tpu.memory_space<vmem>>, %arg6: memref<1x8xf32, #tpu.memory_space<vmem>>, %arg7: memref<32x8xbf16, #tpu.memory_space<vmem>>, %arg8: memref<1x8xf32, #tpu.memory_space<vmem>>, %arg9: memref<32x8xbf16, #tpu.memory_space<vmem>>, %arg10: memref<1x8xf32, #tpu.memory_space<vmem>>, %arg11: memref<1x8x8xf32, #tpu.memory_space<vmem>>) attributes {dimension_semantics = [#tpu.dimension_semantics<parallel>], iteration_bounds = array<i64: 2>, scalar_prefetch = 0 : i64, scratch_operands = 0 : i64, tpu.core_type = #tpu.core_type<tc>, window_params = [{transform_indices = @transform_0, window_bounds = array<i64: 1, 8, 32>}, {transform_indices = @transform_1, window_bounds = array<i64: 1, 8, 32>}, {transform_indices = @transform_2, window_bounds = array<i64: 1, 8, 32>}, {transform_indices = @transform_3, window_bounds = array<i64: 1, 8, 8>}, {pipeline_mode = #tpu.pipeline_mode<synchronous>, transform_indices = @transform_4, window_bounds = array<i64: 32, 8>}, {pipeline_mode = #tpu.pipeline_mode<synchronous>, transform_indices = @transform_5, window_bounds = array<i64: 1, 8>}, {pipeline_mode = #tpu.pipeline_mode<synchronous>, transform_indices = @transform_6, window_bounds = array<i64: 32, 8>}, {pipeline_mode = #tpu.pipeline_mode<synchronous>, transform_indices = @transform_7, window_bounds = array<i64: 1, 8>}, {pipeline_mode = #tpu.pipeline_mode<synchronous>, transform_indices = @transform_8, window_bounds = array<i64: 32, 8>}, {pipeline_mode = #tpu.pipeline_mode<synchronous>, transform_indices = @transform_9, window_bounds = array<i64: 1, 8>}, {transform_indices = @transform_10, window_bounds = array<i64: 1, 8, 8>}]} {
    %c0 = arith.constant 0 : index
    %c0_0 = arith.constant 0 : index
    %c0_1 = arith.constant 0 : index
    %0 = vector.load %arg1[%c0, %c0_0, %c0_1] : memref<1x8x32xf32, #tpu.memory_space<vmem>>, vector<1x8x32xf32>
    %1 = vector.shape_cast %0 : vector<1x8x32xf32> to vector<8x32xf32>
    %2 = arith.truncf %1 : vector<8x32xf32> to vector<8x32xbf16>
    %c0_2 = arith.constant 0 : index
    %c0_3 = arith.constant 0 : index
    %c0_4 = arith.constant 0 : index
    %3 = vector.load %arg2[%c0_2, %c0_3, %c0_4] : memref<1x8x32xf32, #tpu.memory_space<vmem>>, vector<1x8x32xf32>
    %4 = vector.shape_cast %3 : vector<1x8x32xf32> to vector<8x32xf32>
    %5 = arith.truncf %4 : vector<8x32xf32> to vector<8x32xbf16>
    %c0_5 = arith.constant 0 : index
    %c0_6 = arith.constant 0 : index
    %c0_7 = arith.constant 0 : index
    %6 = vector.load %arg3[%c0_5, %c0_6, %c0_7] : memref<1x8x32xf32, #tpu.memory_space<vmem>>, vector<1x8x32xf32>
    %7 = vector.shape_cast %6 : vector<1x8x32xf32> to vector<8x32xf32>
    %8 = arith.truncf %7 : vector<8x32xf32> to vector<8x32xbf16>
    %c0_8 = arith.constant 0 : index
    %c0_9 = arith.constant 0 : index
    %9 = vector.load %arg5[%c0_8, %c0_9] : memref<32x8xbf16, #tpu.memory_space<vmem>>, vector<32x8xbf16>
    %cst = arith.constant dense<0.000000e+00> : vector<8x8xf32>
    %10 = tpu.matmul %2, %9, %cst {dimension_numbers = #tpu.dot_dimension_numbers<[1], [0], [0], [1], [0, 0, 1, 1], [], []>} : vector<8x32xbf16>, vector<32x8xbf16>, vector<8x8xf32> -> vector<8x8xf32>
    %c0_10 = arith.constant 0 : index
    %c0_11 = arith.constant 0 : index
    %11 = vector.load %arg6[%c0_10, %c0_11] : memref<1x8xf32, #tpu.memory_space<vmem>>, vector<1x8xf32>
    %12 = vector.broadcast %11 : vector<1x8xf32> to vector<8x8xf32>
    %13 = arith.addf %10, %12 : vector<8x8xf32>
    %c0_12 = arith.constant 0 : index
    %c0_13 = arith.constant 0 : index
    %14 = vector.load %arg7[%c0_12, %c0_13] : memref<32x8xbf16, #tpu.memory_space<vmem>>, vector<32x8xbf16>
    %cst_14 = arith.constant dense<0.000000e+00> : vector<8x8xf32>
    %15 = tpu.matmul %5, %14, %cst_14 {dimension_numbers = #tpu.dot_dimension_numbers<[1], [0], [0], [1], [0, 0, 1, 1], [], []>} : vector<8x32xbf16>, vector<32x8xbf16>, vector<8x8xf32> -> vector<8x8xf32>
    %c0_15 = arith.constant 0 : index
    %c0_16 = arith.constant 0 : index
    %16 = vector.load %arg8[%c0_15, %c0_16] : memref<1x8xf32, #tpu.memory_space<vmem>>, vector<1x8xf32>
    %17 = vector.broadcast %16 : vector<1x8xf32> to vector<8x8xf32>
    %18 = arith.addf %15, %17 : vector<8x8xf32>
    %c0_17 = arith.constant 0 : index
    %c0_18 = arith.constant 0 : index
    %19 = vector.load %arg9[%c0_17, %c0_18] : memref<32x8xbf16, #tpu.memory_space<vmem>>, vector<32x8xbf16>
    %cst_19 = arith.constant dense<0.000000e+00> : vector<8x8xf32>
    %20 = tpu.matmul %8, %19, %cst_19 {dimension_numbers = #tpu.dot_dimension_numbers<[1], [0], [0], [1], [0, 0, 1, 1], [], []>} : vector<8x32xbf16>, vector<32x8xbf16>, vector<8x8xf32> -> vector<8x8xf32>
    %c0_20 = arith.constant 0 : index
    %c0_21 = arith.constant 0 : index
    %21 = vector.load %arg10[%c0_20, %c0_21] : memref<1x8xf32, #tpu.memory_space<vmem>>, vector<1x8xf32>
    %22 = vector.broadcast %21 : vector<1x8xf32> to vector<8x8xf32>
    %23 = arith.addf %20, %22 : vector<8x8xf32>
    %24 = arith.truncf %13 : vector<8x8xf32> to vector<8x8xbf16>
    %25 = arith.truncf %18 : vector<8x8xf32> to vector<8x8xbf16>
    %cst_22 = arith.constant dense<0.000000e+00> : vector<8x8xf32>
    %26 = tpu.matmul %24, %25, %cst_22 {dimension_numbers = #tpu.dot_dimension_numbers<[1], [1], [0], [0], [0, 0, 1, 0], [], []>} : vector<8x8xbf16>, vector<8x8xbf16>, vector<8x8xf32> -> vector<8x8xf32>
    %c0_23 = arith.constant 0 : index
    %c0_24 = arith.constant 0 : index
    %c0_25 = arith.constant 0 : index
    %27 = vector.load %arg4[%c0_23, %c0_24, %c0_25] : memref<1x8x8xi32, #tpu.memory_space<vmem>>, vector<1x8x8xi32>
    %28 = vector.shape_cast %27 : vector<1x8x8xi32> to vector<8x8xi32>
    %c0_i32 = arith.constant 0 : i32
    %29 = vector.broadcast %c0_i32 : i32 to vector<8x8xi32>
    %30 = arith.cmpi eq, %28, %29 : vector<8x8xi32>
    %cst_26 = arith.constant 0xFF800000 : f32
    %31 = vector.broadcast %cst_26 : f32 to vector<8x8xf32>
    %32 = arith.select %30, %31, %26 : vector<8x8xi1>, vector<8x8xf32>
    %cst_27 = arith.constant dense<0xFF800000> : vector<8xf32>
    %33 = vector.multi_reduction <maximumf>, %32, %cst_27 [1] : vector<8x8xf32> to vector<8xf32>
    %34 = vector.shape_cast %33 : vector<8xf32> to vector<8x1xf32>
    %35 = vector.broadcast %34 : vector<8x1xf32> to vector<8x8xf32>
    %36 = arith.subf %32, %35 : vector<8x8xf32>
    %37 = math.exp %36 : vector<8x8xf32>
    %cst_28 = arith.constant dense<0.000000e+00> : vector<8xf32>
    %38 = vector.multi_reduction <add>, %37, %cst_28 [1] : vector<8x8xf32> to vector<8xf32>
    %39 = vector.shape_cast %38 : vector<8xf32> to vector<8x1xf32>
    %40 = tpu.reciprocal %39 {approx = true} : vector<8x1xf32> -> vector<8x1xf32>
    %41 = vector.broadcast %40 : vector<8x1xf32> to vector<8x8xf32>
    %42 = arith.mulf %37, %41 : vector<8x8xf32>
    %43 = arith.truncf %42 : vector<8x8xf32> to vector<8x8xbf16>
    %44 = arith.truncf %23 : vector<8x8xf32> to vector<8x8xbf16>
    %cst_29 = arith.constant dense<0.000000e+00> : vector<8x8xf32>
    %45 = tpu.matmul %43, %44, %cst_29 {dimension_numbers = #tpu.dot_dimension_numbers<[1], [0], [0], [1], [0, 0, 1, 1], [], []>} : vector<8x8xbf16>, vector<8x8xbf16>, vector<8x8xf32> -> vector<8x8xf32>
    %c0_30 = arith.constant 0 : index
    %c0_31 = arith.constant 0 : index
    %c0_32 = arith.constant 0 : index
    %46 = vector.load %arg11[%c0_30, %c0_31, %c0_32] : memref<1x8x8xf32, #tpu.memory_space<vmem>>, vector<1x8x8xf32>
    %47 = vector.shape_cast %46 : vector<1x8x8xf32> to vector<8x8xf32>
    %48 = vector.shape_cast %45 : vector<8x8xf32> to vector<1x8x8xf32>
    tpu.vector_store %arg11[%c0_30, %c0_31, %c0_32], %48 {strides = array<i32>} : memref<1x8x8xf32, #tpu.memory_space<vmem>>, vector<1x8x8xf32>,
    return
  }
  func.func @transform_0(%arg0: i32) -> (i32, i32, i32) {
    %c0_i32 = arith.constant 0 : i32
    %c0_i32_0 = arith.constant 0 : i32
    %c0_i32_1 = arith.constant 0 : i32
    return %arg0, %c0_i32, %c0_i32_0 : i32, i32, i32
  }
  func.func @transform_1(%arg0: i32) -> (i32, i32, i32) {
    %c0_i32 = arith.constant 0 : i32
    %c0_i32_0 = arith.constant 0 : i32
    %c0_i32_1 = arith.constant 0 : i32
    return %arg0, %c0_i32, %c0_i32_0 : i32, i32, i32
  }
  func.func @transform_2(%arg0: i32) -> (i32, i32, i32) {
    %c0_i32 = arith.constant 0 : i32
    %c0_i32_0 = arith.constant 0 : i32
    %c0_i32_1 = arith.constant 0 : i32
    return %arg0, %c0_i32, %c0_i32_0 : i32, i32, i32
  }
  func.func @transform_3(%arg0: i32) -> (i32, i32, i32) {
    %c0_i32 = arith.constant 0 : i32
    %c0_i32_0 = arith.constant 0 : i32
    %c0_i32_1 = arith.constant 0 : i32
    return %arg0, %c0_i32, %c0_i32_0 : i32, i32, i32
  }
  func.func @transform_4(%arg0: i32) -> (i32, i32) {
    %c0_i32 = arith.constant 0 : i32
    %c0_i32_0 = arith.constant 0 : i32
    %c0_i32_1 = arith.constant 0 : i32
    return %c0_i32, %c0_i32_0 : i32, i32
  }
  func.func @transform_5(%arg0: i32) -> (i32, i32) {
    %c0_i32 = arith.constant 0 : i32
    %c0_i32_0 = arith.constant 0 : i32
    %c0_i32_1 = arith.constant 0 : i32
    return %c0_i32, %c0_i32_0 : i32, i32
  }
  func.func @transform_6(%arg0: i32) -> (i32, i32) {
    %c0_i32 = arith.constant 0 : i32
    %c0_i32_0 = arith.constant 0 : i32
    %c0_i32_1 = arith.constant 0 : i32
    return %c0_i32, %c0_i32_0 : i32, i32
  }
  func.func @transform_7(%arg0: i32) -> (i32, i32) {
    %c0_i32 = arith.constant 0 : i32
    %c0_i32_0 = arith.constant 0 : i32
    %c0_i32_1 = arith.constant 0 : i32
    return %c0_i32, %c0_i32_0 : i32, i32
  }
  func.func @transform_8(%arg0: i32) -> (i32, i32) {
    %c0_i32 = arith.constant 0 : i32
    %c0_i32_0 = arith.constant 0 : i32
    %c0_i32_1 = arith.constant 0 : i32
    return %c0_i32, %c0_i32_0 : i32, i32
  }
  func.func @transform_9(%arg0: i32) -> (i32, i32) {
    %c0_i32 = arith.constant 0 : i32
    %c0_i32_0 = arith.constant 0 : i32
    %c0_i32_1 = arith.constant 0 : i32
    return %c0_i32, %c0_i32_0 : i32, i32
  }
  func.func @transform_10(%arg0: i32) -> (i32, i32, i32) {
    %c0_i32 = arith.constant 0 : i32
    %c0_i32_0 = arith.constant 0 : i32
    %c0_i32_1 = arith.constant 0 : i32
    return %arg0, %c0_i32, %c0_i32_0 : i32, i32, i32
  }
}

</mosaic_0001>

<llo_original>
// kernel: tpu_custom_call.1
$region0: #{tpu_custom_call.1}
  #allocation0 [shape = 'u32[]', space=smem, size = 0x4, offset = 0x4, fixed_abs, tag = 'smem constant byte address 0x4 - core index']
  #allocation1 [shape = 'u32[144,128]{1,0:T(1,128)}', space=vmem, size = 0x12000, scoped, tag = 'internal scratch']
  %s0 = inlined_call_operand.vmem [shape: f32[2,8,32], index: 0, kind: input, shape index: {}]
  %s1 = inlined_call_operand.vmem [shape: f32[2,8,32], index: 1, kind: input, shape index: {}]
  %s2 = inlined_call_operand.vmem [shape: f32[2,8,32], index: 2, kind: input, shape index: {}]
  %s3 = inlined_call_operand.vmem [shape: s32[2,8,8], index: 3, kind: input, shape index: {}]
  %s4 = inlined_call_operand.vmem [shape: bf16[32,8], index: 4, kind: input, shape index: {}]
  %s5 = inlined_call_operand.vmem [shape: f32[1,8], index: 5, kind: input, shape index: {}]
  %s6 = inlined_call_operand.vmem [shape: bf16[32,8], index: 6, kind: input, shape index: {}]
  %s7 = inlined_call_operand.vmem [shape: f32[1,8], index: 7, kind: input, shape index: {}]
  %s8 = inlined_call_operand.vmem [shape: bf16[32,8], index: 8, kind: input, shape index: {}]
  %s9 = inlined_call_operand.vmem [shape: f32[1,8], index: 9, kind: input, shape index: {}]
  %s10 = inlined_call_operand.hbm [shape: f32[2,8,8], index: 10, kind: output, shape index: {}]
  %s11 = sld [smem:[#allocation0]]
  $region73: #{tpu_custom_call.1} parent=0
    _
  %s13 = ssub.s32 1, %s11
  %s14 = scalar_select 0, %s13, %s11
  $region1: #{tpu_custom_call.1} parent=0
    #allocation2 [shape = 'u8[8192]{0}', space=vmem, size = 0x2000, scoped, tag = 'output window, operand 0']
    #allocation3 [shape = 's32[2]{0}', space=sflag, size = 0x8, scoped, tag = 'scoped memory for tpu_custom_call.1']
    %15 = vsyncpa [#allocation3], 0
    %s16 = scalar_lea.sflag [#allocation3], 1
    %17 = vsyncpa %s16, 0
    loop: start=0, step=1, limit=4
    $region2: #{tpu_custom_call.1} parent=1 // loop_pre_header
      _
    $region3: #{tpu_custom_call.1} parent=1 // loop_header
      %s19 = sphi 0, %s23
      %p20 = scmp.ge.s32.totalorder %s19, 4
      %s29 = sphi 0, %s31
      %s32 = sphi 0, %s29
      %s33 = sphi 0, %s32
      %s49 = sphi 0, %s33
      %s55 = sphi 0, %s57
      %s58 = sphi 0, %s55
      %s59 = sphi 0, %s58
      %s75 = sphi 0, %s59
      %s81 = sphi 0, %s83
      %s84 = sphi 0, %s81
      %s85 = sphi 0, %s84
      %s101 = sphi 0, %s85
      %s107 = sphi 0, %s109
      %s110 = sphi 0, %s107
      %s111 = sphi 0, %s110
      %s127 = sphi 0, %s111
      %s131 = sphi 0, %s131
      %s133 = sphi 0, %s131
      %s134 = sphi 0, %s133
      %s148 = sphi 0, %s134
      %s152 = sphi 0, %s152
      %s154 = sphi 0, %s152
      %s155 = sphi 0, %s154
      %s169 = sphi 0, %s155
      %s173 = sphi 0, %s173
      %s175 = sphi 0, %s173
      %s176 = sphi 0, %s175
      %s190 = sphi 0, %s176
      %s194 = sphi 0, %s194
      %s196 = sphi 0, %s194
      %s197 = sphi 0, %s196
      %s211 = sphi 0, %s197
      %s215 = sphi 0, %s215
      %s217 = sphi 0, %s215
      %s218 = sphi 0, %s217
      %s232 = sphi 0, %s218
      %s236 = sphi 0, %s236
      %s238 = sphi 0, %s236
      %s239 = sphi 0, %s238
      %s253 = sphi 0, %s239
      %s259 = sphi 0, %s261
      %s262 = sphi 0, %s259
      %s263 = sphi 0, %s262
      %s279 = sphi 0, %s263
    $region4: #{tpu_custom_call.1} parent=1 // loop_header_branch
      %22 = sbr.rel (%p20) target = $region8
    $region5: #{tpu_custom_call.1} parent=1 // loop_body
      %s24 = ssub.s32 %s19, 1
      %s25 = ssub.s32 %s19, 2
      %s26 = sadd.s32 %s19, 1
      %s27 = ssub.s32 %s19, %s26
      %p28 = scmp.eq.s32.totalorder %s27, 0
      %s30 = sadd.s32 %s29, 1
      %s31 = scalar_select %p28, %s29, %s30
      %p34 = pneg %p28
      %p35 = scmp.eq.s32.totalorder %s19, 1
      %p36 = por %p34, %p35
      %p37 = scmp.ne.s32.totalorder %s29, %s32
      %p38 = scmp.eq.s32.totalorder %s19, 0
      %p39 = por %p37, %p38
      %p40 = scmp.ne.s32.totalorder %s29, %s32
      %p41 = scmp.eq.s32.totalorder %s24, 1
      %p42 = por %p40, %p41
      %p43 = scmp.ne.s32.totalorder %s32, %s33
      %p44 = scmp.eq.s32.totalorder %s24, 0
      %p45 = por %p43, %p44
      %p46 = scmp.ne.s32.totalorder %s32, %s33
      %p47 = scmp.eq.s32.totalorder %s25, 1
      %p48 = por %p46, %p47
      %p50 = scmp.ne.s32.totalorder %s33, %s49
      %p51 = scmp.eq.s32.totalorder %s25, 0
      %p52 = por %p50, %p51
      %s53 = ssub.s32 %s19, %s26
      %p54 = scmp.eq.s32.totalorder %s53, 0
      %s56 = sadd.s32 %s55, 1
      %s57 = scalar_select %p54, %s55, %s56
      %p60 = pneg %p54
      %p61 = scmp.eq.s32.totalorder %s19, 1
      %p62 = por %p60, %p61
      %p63 = scmp.ne.s32.totalorder %s55, %s58
      %p64 = scmp.eq.s32.totalorder %s19, 0
      %p65 = por %p63, %p64
      %p66 = scmp.ne.s32.totalorder %s55, %s58
      %p67 = scmp.eq.s32.totalorder %s24, 1
      %p68 = por %p66, %p67
      %p69 = scmp.ne.s32.totalorder %s58, %s59
      %p70 = scmp.eq.s32.totalorder %s24, 0
      %p71 = por %p69, %p70
      %p72 = scmp.ne.s32.totalorder %s58, %s59
      %p73 = scmp.eq.s32.totalorder %s25, 1
      %p74 = por %p72, %p73
      %p76 = scmp.ne.s32.totalorder %s59, %s75
      %p77 = scmp.eq.s32.totalorder %s25, 0
      %p78 = por %p76, %p77
      %s79 = ssub.s32 %s19, %s26
      %p80 = scmp.eq.s32.totalorder %s79, 0
      %s82 = sadd.s32 %s81, 1
      %s83 = scalar_select %p80, %s81, %s82
      %p86 = pneg %p80
      %p87 = scmp.eq.s32.totalorder %s19, 1
      %p88 = por %p86, %p87
      %p89 = scmp.ne.s32.totalorder %s81, %s84
      %p90 = scmp.eq.s32.totalorder %s19, 0
      %p91 = por %p89, %p90
      %p92 = scmp.ne.s32.totalorder %s81, %s84
      %p93 = scmp.eq.s32.totalorder %s24, 1
      %p94 = por %p92, %p93
      %p95 = scmp.ne.s32.totalorder %s84, %s85
      %p96 = scmp.eq.s32.totalorder %s24, 0
      %p97 = por %p95, %p96
      %p98 = scmp.ne.s32.totalorder %s84, %s85
      %p99 = scmp.eq.s32.totalorder %s25, 1
      %p100 = por %p98, %p99
      %p102 = scmp.ne.s32.totalorder %s85, %s101
      %p103 = scmp.eq.s32.totalorder %s25, 0
      %p104 = por %p102, %p103
      %s105 = ssub.s32 %s19, %s26
      %p106 = scmp.eq.s32.totalorder %s105, 0
      %s108 = sadd.s32 %s107, 1
      %s109 = scalar_select %p106, %s107, %s108
      %p112 = pneg %p106
      %p113 = scmp.eq.s32.totalorder %s19, 1
      %p114 = por %p112, %p113
      %p115 = scmp.ne.s32.totalorder %s107, %s110
      %p116 = scmp.eq.s32.totalorder %s19, 0
      %p117 = por %p115, %p116
      %p118 = scmp.ne.s32.totalorder %s107, %s110
      %p119 = scmp.eq.s32.totalorder %s24, 1
      %p120 = por %p118, %p119
      %p121 = scmp.ne.s32.totalorder %s110, %s111
      %p122 = scmp.eq.s32.totalorder %s24, 0
      %p123 = por %p121, %p122
      %p124 = scmp.ne.s32.totalorder %s110, %s111
      %p125 = scmp.eq.s32.totalorder %s25, 1
      %p126 = por %p124, %p125
      %p128 = scmp.ne.s32.totalorder %s111, %s127
      %p129 = scmp.eq.s32.totalorder %s25, 0
      %p130 = por %p128, %p129
      %s132 = sadd.s32 %s131, 1
      %p135 = scmp.eq.s32.totalorder %s19, 1
      %p136 = scmp.ne.s32.totalorder %s131, %s133
      %p137 = scmp.eq.s32.totalorder %s19, 0
      %p138 = por %p136, %p137
      %p139 = scmp.ne.s32.totalorder %s131, %s133
      %p140 = scmp.eq.s32.totalorder %s24, 1
      %p141 = por %p139, %p140
      %p142 = scmp.ne.s32.totalorder %s133, %s134
      %p143 = scmp.eq.s32.totalorder %s24, 0
      %p144 = por %p142, %p143
      %p145 = scmp.ne.s32.totalorder %s133, %s134
      %p146 = scmp.eq.s32.totalorder %s25, 1
      %p147 = por %p145, %p146
      %p149 = scmp.ne.s32.totalorder %s134, %s148
      %p150 = scmp.eq.s32.totalorder %s25, 0
      %p151 = por %p149, %p150
      %s153 = sadd.s32 %s152, 1
      %p156 = scmp.eq.s32.totalorder %s19, 1
      %p157 = scmp.ne.s32.totalorder %s152, %s154
      %p158 = scmp.eq.s32.totalorder %s19, 0
      %p159 = por %p157, %p158
      %p160 = scmp.ne.s32.totalorder %s152, %s154
      %p161 = scmp.eq.s32.totalorder %s24, 1
      %p162 = por %p160, %p161
      %p163 = scmp.ne.s32.totalorder %s154, %s155
      %p164 = scmp.eq.s32.totalorder %s24, 0
      %p165 = por %p163, %p164
      %p166 = scmp.ne.s32.totalorder %s154, %s155
      %p167 = scmp.eq.s32.totalorder %s25, 1
      %p168 = por %p166, %p167
      %p170 = scmp.ne.s32.totalorder %s155, %s169
      %p171 = scmp.eq.s32.totalorder %s25, 0
      %p172 = por %p170, %p171
      %s174 = sadd.s32 %s173, 1
      %p177 = scmp.eq.s32.totalorder %s19, 1
      %p178 = scmp.ne.s32.totalorder %s173, %s175
      %p179 = scmp.eq.s32.totalorder %s19, 0
      %p180 = por %p178, %p179
      %p181 = scmp.ne.s32.totalorder %s173, %s175
      %p182 = scmp.eq.s32.totalorder %s24, 1
      %p183 = por %p181, %p182
      %p184 = scmp.ne.s32.totalorder %s175, %s176
      %p185 = scmp.eq.s32.totalorder %s24, 0
      %p186 = por %p184, %p185
      %p187 = scmp.ne.s32.totalorder %s175, %s176
      %p188 = scmp.eq.s32.totalorder %s25, 1
      %p189 = por %p187, %p188
      %p191 = scmp.ne.s32.totalorder %s176, %s190
      %p192 = scmp.eq.s32.totalorder %s25, 0
      %p193 = por %p191, %p192
      %s195 = sadd.s32 %s194, 1
      %p198 = scmp.eq.s32.totalorder %s19, 1
      %p199 = scmp.ne.s32.totalorder %s194, %s196
      %p200 = scmp.eq.s32.totalorder %s19, 0
      %p201 = por %p199, %p200
      %p202 = scmp.ne.s32.totalorder %s194, %s196
      %p203 = scmp.eq.s32.totalorder %s24, 1
      %p204 = por %p202, %p203
      %p205 = scmp.ne.s32.totalorder %s196, %s197
      %p206 = scmp.eq.s32.totalorder %s24, 0
      %p207 = por %p205, %p206
      %p208 = scmp.ne.s32.totalorder %s196, %s197
      %p209 = scmp.eq.s32.totalorder %s25, 1
      %p210 = por %p208, %p209
      %p212 = scmp.ne.s32.totalorder %s197, %s211
      %p213 = scmp.eq.s32.totalorder %s25, 0
      %p214 = por %p212, %p213
      %s216 = sadd.s32 %s215, 1
      %p219 = scmp.eq.s32.totalorder %s19, 1
      %p220 = scmp.ne.s32.totalorder %s215, %s217
      %p221 = scmp.eq.s32.totalorder %s19, 0
      %p222 = por %p220, %p221
      %p223 = scmp.ne.s32.totalorder %s215, %s217
      %p224 = scmp.eq.s32.totalorder %s24, 1
      %p225 = por %p223, %p224
      %p226 = scmp.ne.s32.totalorder %s217, %s218
      %p227 = scmp.eq.s32.totalorder %s24, 0
      %p228 = por %p226, %p227
      %p229 = scmp.ne.s32.totalorder %s217, %s218
      %p230 = scmp.eq.s32.totalorder %s25, 1
      %p231 = por %p229, %p230
      %p233 = scmp.ne.s32.totalorder %s218, %s232
      %p234 = scmp.eq.s32.totalorder %s25, 0
      %p235 = por %p233, %p234
      %s237 = sadd.s32 %s236, 1
      %p240 = scmp.eq.s32.totalorder %s19, 1
      %p241 = scmp.ne.s32.totalorder %s236, %s238
      %p242 = scmp.eq.s32.totalorder %s19, 0
      %p243 = por %p241, %p242
      %p244 = scmp.ne.s32.totalorder %s236, %s238
      %p245 = scmp.eq.s32.totalorder %s24, 1
      %p246 = por %p244, %p245
      %p247 = scmp.ne.s32.totalorder %s238, %s239
      %p248 = scmp.eq.s32.totalorder %s24, 0
      %p249 = por %p247, %p248
      %p250 = scmp.ne.s32.totalorder %s238, %s239
      %p251 = scmp.eq.s32.totalorder %s25, 1
      %p252 = por %p250, %p251
      %p254 = scmp.ne.s32.totalorder %s239, %s253
      %p255 = scmp.eq.s32.totalorder %s25, 0
      %p256 = por %p254, %p255
      %s257 = ssub.s32 %s19, %s26
      %p258 = scmp.eq.s32.totalorder %s257, 0
      %s260 = sadd.s32 %s259, 1
      %s261 = scalar_select %p258, %s259, %s260
      %p264 = pneg %p258
      %p265 = scmp.eq.s32.totalorder %s19, 1
      %p266 = por %p264, %p265
      %p267 = scmp.ne.s32.totalorder %s259, %s262
      %p268 = scmp.eq.s32.totalorder %s19, 0
      %p269 = por %p267, %p268
      %p270 = scmp.ne.s32.totalorder %s259, %s262
      %p271 = scmp.eq.s32.totalorder %s24, 1
      %p272 = por %p270, %p271
      %p273 = scmp.ne.s32.totalorder %s262, %s263
      %p274 = scmp.eq.s32.totalorder %s24, 0
      %p275 = por %p273, %p274
      %p276 = scmp.ne.s32.totalorder %s262, %s263
      %p277 = scmp.eq.s32.totalorder %s25, 1
      %p278 = por %p276, %p277
      %p280 = scmp.ne.s32.totalorder %s263, %s279
      %p281 = scmp.eq.s32.totalorder %s25, 0
      %p282 = por %p280, %p281
      %p283 = scmp.le.s32.totalorder 1, %s19
      %p284 = scmp.lt.s32.totalorder %s19, 3
      %p285 = pnand %p283, %p284
      %p286 = pneg %p285
      // Predicated region
      $region9: #{tpu_custom_call.1} parent=5 // pred_check
        _
      $region10: #{tpu_custom_call.1} parent=5 // pred_check_branch
        %288 = sbr.rel (%p285) target = $region12
      $region11: #{tpu_custom_call.1} parent=5 // pred_region
        %s289 = ssub.s32 %s19, 1
        // Predicated region
        $region13: #{tpu_custom_call.1} parent=11 // pred_check
          %p290 = pneg %p144
        $region14: #{tpu_custom_call.1} parent=11 // pred_check_branch
          %292 = sbr.rel (%p290) target = $region16
        $region15: #{tpu_custom_call.1} parent=11 // pred_region
          _
        $region16: #{tpu_custom_call.1} parent=11 // pred_fallthru
          _
        // Predicated region
        $region17: #{tpu_custom_call.1} parent=11 // pred_check
          %p293 = pneg %p165
        $region18: #{tpu_custom_call.1} parent=11 // pred_check_branch
          %295 = sbr.rel (%p293) target = $region20
        $region19: #{tpu_custom_call.1} parent=11 // pred_region
          _
        $region20: #{tpu_custom_call.1} parent=11 // pred_fallthru
          _
        // Predicated region
        $region21: #{tpu_custom_call.1} parent=11 // pred_check
          %p296 = pneg %p186
        $region22: #{tpu_custom_call.1} parent=11 // pred_check_branch
          %298 = sbr.rel (%p296) target = $region24
        $region23: #{tpu_custom_call.1} parent=11 // pred_region
          _
        $region24: #{tpu_custom_call.1} parent=11 // pred_fallthru
          _
        // Predicated region
        $region25: #{tpu_custom_call.1} parent=11 // pred_check
          %p299 = pneg %p207
        $region26: #{tpu_custom_call.1} parent=11 // pred_check_branch
          %301 = sbr.rel (%p299) target = $region28
        $region27: #{tpu_custom_call.1} parent=11 // pred_region
          _
        $region28: #{tpu_custom_call.1} parent=11 // pred_fallthru
          _
        // Predicated region
        $region29: #{tpu_custom_call.1} parent=11 // pred_check
          %p302 = pneg %p228
        $region30: #{tpu_custom_call.1} parent=11 // pred_check_branch
          %304 = sbr.rel (%p302) target = $region32
        $region31: #{tpu_custom_call.1} parent=11 // pred_region
          _
        $region32: #{tpu_custom_call.1} parent=11 // pred_fallthru
          _
        // Predicated region
        $region33: #{tpu_custom_call.1} parent=11 // pred_check
          %p305 = pneg %p249
        $region34: #{tpu_custom_call.1} parent=11 // pred_check_branch
          %307 = sbr.rel (%p305) target = $region36
        $region35: #{tpu_custom_call.1} parent=11 // pred_region
          _
        $region36: #{tpu_custom_call.1} parent=11 // pred_fallthru
          _
      $region12: #{tpu_custom_call.1} parent=5 // pred_fallthru
        _
      %p308 = scmp.lt.s32.totalorder %s19, 2
      // Predicated region
      $region37: #{tpu_custom_call.1} parent=5 // pred_check
        %p309 = pneg %p308
      $region38: #{tpu_custom_call.1} parent=5 // pred_check_branch
        %311 = sbr.rel (%p309) target = $region40
      $region39: #{tpu_custom_call.1} parent=5 // pred_region
        // Predicated region
        $region41: #{tpu_custom_call.1} parent=39 // pred_check
          %p312 = pneg %p39
        $region42: #{tpu_custom_call.1} parent=39 // pred_check_branch
          %314 = sbr.rel (%p312) target = $region44
        $region43: #{tpu_custom_call.1} parent=39 // pred_region
          %p315 = scmp.lt.s32.totalorder %s19, 1
          %s316 = scalar_select %p315, %s19, 1
          %s317 = smul.addr %s316, 8
          %s318 = scalar_lea.vmem %s0, %s317
        $region44: #{tpu_custom_call.1} parent=39 // pred_fallthru
          _
        // Predicated region
        $region45: #{tpu_custom_call.1} parent=39 // pred_check
          %p319 = pneg %p65
        $region46: #{tpu_custom_call.1} parent=39 // pred_check_branch
          %321 = sbr.rel (%p319) target = $region48
        $region47: #{tpu_custom_call.1} parent=39 // pred_region
          %p322 = scmp.lt.s32.totalorder %s19, 1
          %s323 = scalar_select %p322, %s19, 1
          %s324 = smul.addr %s323, 8
          %s325 = scalar_lea.vmem %s1, %s324
        $region48: #{tpu_custom_call.1} parent=39 // pred_fallthru
          _
        // Predicated region
        $region49: #{tpu_custom_call.1} parent=39 // pred_check
          %p326 = pneg %p91
        $region50: #{tpu_custom_call.1} parent=39 // pred_check_branch
          %328 = sbr.rel (%p326) target = $region52
        $region51: #{tpu_custom_call.1} parent=39 // pred_region
          %p329 = scmp.lt.s32.totalorder %s19, 1
          %s330 = scalar_select %p329, %s19, 1
          %s331 = smul.addr %s330, 8
          %s332 = scalar_lea.vmem %s2, %s331
        $region52: #{tpu_custom_call.1} parent=39 // pred_fallthru
          _
        // Predicated region
        $region53: #{tpu_custom_call.1} parent=39 // pred_check
          %p333 = pneg %p117
        $region54: #{tpu_custom_call.1} parent=39 // pred_check_branch
          %335 = sbr.rel (%p333) target = $region56
        $region55: #{tpu_custom_call.1} parent=39 // pred_region
          %p336 = scmp.lt.s32.totalorder %s19, 1
          %s337 = scalar_select %p336, %s19, 1
          %s338 = smul.addr %s337, 8
          %s339 = scalar_lea.vmem %s3, %s338
        $region56: #{tpu_custom_call.1} parent=39 // pred_fallthru
          _
      $region40: #{tpu_custom_call.1} parent=5 // pred_fallthru
        _
      %p340 = scmp.le.s32.totalorder 1, %s19
      %p341 = scmp.lt.s32.totalorder %s19, 3
      %p342 = pnand %p340, %p341
      %p343 = pneg %p342
      // Predicated region
      $region57: #{tpu_custom_call.1} parent=5 // pred_check
        _
      $region58: #{tpu_custom_call.1} parent=5 // pred_check_branch
        %345 = sbr.rel (%p342) target = $region60
      $region59: #{tpu_custom_call.1} parent=5 // pred_region
        %s346 = ssub.s32 %s19, 1
        %p347 = scmp.lt.s32.totalorder %s24, 1
        %s348 = scalar_select %p347, %s24, 1
        %s349 = smul.addr %s348, 8
        %s350 = scalar_lea.vmem %s0, %s349
        %p351 = pneg %p45
        %p352 = pneg %p42
        %p353 = scmp.lt.s32.totalorder %s24, 1
        %s354 = scalar_select %p353, %s24, 1
        %s355 = smul.addr %s354, 8
        %s356 = scalar_lea.vmem %s1, %s355
        %p357 = pneg %p71
        %p358 = pneg %p68
        %p359 = scmp.lt.s32.totalorder %s24, 1
        %s360 = scalar_select %p359, %s24, 1
        %s361 = smul.addr %s360, 8
        %s362 = scalar_lea.vmem %s2, %s361
        %p363 = pneg %p97
        %p364 = pneg %p94
        %p365 = scmp.lt.s32.totalorder %s24, 1
        %s366 = scalar_select %p365, %s24, 1
        %s367 = smul.addr %s366, 8
        %s368 = scalar_lea.vmem %s3, %s367
        %p369 = pneg %p123
        %p370 = pneg %p120
        %p371 = pneg %p144
        %p372 = pneg %p141
        %p373 = pneg %p165
        %p374 = pneg %p162
        %p375 = pneg %p186
        %p376 = pneg %p183
        %p377 = pneg %p207
        %p378 = pneg %p204
        %p379 = pneg %p228
        %p380 = pneg %p225
        %p381 = pneg %p249
        %p382 = pneg %p246
        %p383 = pneg %p275
        %p384 = pneg %p272
        %s385 = sand.u32 %s262, 1
        %s386 = scalar_lea.sflag [#allocation3], %s385
        %s387 = sand.u32 %s262, 1
        %s388 = smul.addr %s387, 8
        %s389 = scalar_lea.vmem [#allocation2], %s388
        %p390 = scmp.lt.s32.totalorder %s24, 1
        %s391 = scalar_select %p390, %s24, 1
        %s392 = smul.addr %s391, 8
        %s393 = scalar_lea.vmem %s0, %s392
        %p394 = scmp.lt.s32.totalorder %s24, 1
        %s395 = scalar_select %p394, %s24, 1
        %s396 = smul.addr %s395, 8
        %s397 = scalar_lea.vmem %s1, %s396
        %p398 = scmp.lt.s32.totalorder %s24, 1
        %s399 = scalar_select %p398, %s24, 1
        %s400 = smul.addr %s399, 8
        %s401 = scalar_lea.vmem %s2, %s400
        %p402 = scmp.lt.s32.totalorder %s24, 1
        %s403 = scalar_select %p402, %s24, 1
        %s404 = smul.addr %s403, 8
        %s405 = scalar_lea.vmem %s3, %s404
        %v407 = vld [vmem:[%s393] sm:$0xff]
        %v408 = vpack.c.bf16 %v407, %v407
        %v409 = vld [vmem:[%s397] sm:$0xff]
        %v410 = vpack.c.bf16 %v409, %v409
        %v411 = vld [vmem:[%s401] sm:$0xff]
        %v412 = vpack.c.bf16 %v411, %v411
        %v413 = vld [vmem:[%s4] sm:$0xf]
        %v414 = vld [vmem:[%s4 + $0x4] sm:$0xf]
        %v415 = vld [vmem:[%s4 + $0x8] sm:$0xf]
        %v416 = vld [vmem:[%s4 + $0xc] sm:$0xf]
        %v417 = vld [vmem:[%s5] sm:$0x1]
        %v419 = vlaneseq
        %v420 = vshrl.u32 %v419, 7
        %v421 = vsub.s32 0, %v420
        %v422 = vrot.slane %v417, %v421
        %v428 = vunpack.c.l.b16 %v413
        %v429 = vunpack.c.l.b16 %v414
        %v430 = vunpack.c.l.b16 %v415
        %v431 = vunpack.c.l.b16 %v416
        %v432 = vpack.c.b16 %v429, %v428
        %v433 = vpack.c.b16 %v431, %v430
        %vm436 = vcmask 261120
        %v438 = vsel %vm436, %v408, 0
        %440 = vmatprep.subr.bf16.mxu0 0
        %441 = vmatpush1.bf16.msra.mxu0 %v432
        %442 = vmatprep.subr.bf16.mxu0 0
        %443 = vmatpush1.bf16.msra.mxu0 %v433
        %444 = vmatprep.subr.bf16.mxu0 0
        %445 = vmatpush1.bf16.msra.mxu0 0
        %446 = vmatprep.subr.bf16.mxu0 0
        %447 = vmatpush1.bf16.msra.mxu0 0
        %448 = vmatprep.subr.bf16.mxu0 0
        %449 = vmatpush1.bf16.msra.mxu0 0
        %450 = vmatprep.subr.bf16.mxu0 0
        %451 = vmatpush1.bf16.msra.mxu0 0
        %452 = vmatprep.subr.bf16.mxu0 0
        %453 = vmatpush1.bf16.msra.mxu0 0
        %454 = vmatprep.subr.bf16.mxu0 0
        %455 = vmatpush1.bf16.msra.mxu0 0
        %456 = vmatprep.subr.bf16.mxu0 0
        %457 = vmatpush1.bf16.msra.mxu0 0
        %458 = vmatprep.subr.bf16.mxu0 0
        %459 = vmatpush1.bf16.msra.mxu0 0
        %460 = vmatprep.subr.bf16.mxu0 0
        %461 = vmatpush1.bf16.msra.mxu0 0
        %462 = vmatprep.subr.bf16.mxu0 0
        %463 = vmatpush1.bf16.msra.mxu0 0
        %464 = vmatprep.subr.bf16.mxu0 0
        %465 = vmatpush1.bf16.msra.mxu0 0
        %466 = vmatprep.subr.bf16.mxu0 0
        %467 = vmatpush1.bf16.msra.mxu0 0
        %468 = vmatprep.subr.bf16.mxu0 0
        %469 = vmatpush1.bf16.msra.mxu0 0
        %470 = vmatprep.subr.bf16.mxu0 0
        %471 = vmatpush1.bf16.msra.mxu0 0
        %472 = vmatprep.mubr.bf16.mxu0 0
        %473 = vmatmul.mubr.bf16.gmra.mrb[0].mxu0 %v438
        %v474 = vpop.f32.mrb[0].mxu0
        %v475 = vadd.f32 %v422, %v474
        %v476 = vpop.f32.mrb[0].mxu0
        %v477 = vpop.f32.mrb[0].mxu0
        %v478 = vpop.f32.mrb[0].mxu0
        %479 = vdwg.mxu0
        %v480 = vld [vmem:[%s6] sm:$0xf]
        %v481 = vld [vmem:[%s6 + $0x4] sm:$0xf]
        %v482 = vld [vmem:[%s6 + $0x8] sm:$0xf]
        %v483 = vld [vmem:[%s6 + $0xc] sm:$0xf]
        %v484 = vld [vmem:[%s7] sm:$0x1]
        %v486 = vlaneseq
        %v487 = vshrl.u32 %v486, 7
        %v488 = vsub.s32 0, %v487
        %v489 = vrot.slane %v484, %v488
        %v495 = vunpack.c.l.b16 %v480
        %v496 = vunpack.c.l.b16 %v481
        %v497 = vunpack.c.l.b16 %v482
        %v498 = vunpack.c.l.b16 %v483
        %v499 = vpack.c.b16 %v496, %v495
        %v500 = vpack.c.b16 %v498, %v497
        %v504 = vsel %vm436, %v410, 0
        %506 = vmatprep.subr.bf16.mxu0 0
        %507 = vmatpush1.bf16.msra.mxu0 %v499
        %508 = vmatprep.subr.bf16.mxu0 0
        %509 = vmatpush1.bf16.msra.mxu0 %v500
        %510 = vmatprep.subr.bf16.mxu0 0
        %511 = vmatpush1.bf16.msra.mxu0 0
        %512 = vmatprep.subr.bf16.mxu0 0
        %513 = vmatpush1.bf16.msra.mxu0 0
        %514 = vmatprep.subr.bf16.mxu0 0
        %515 = vmatpush1.bf16.msra.mxu0 0
        %516 = vmatprep.subr.bf16.mxu0 0
        %517 = vmatpush1.bf16.msra.mxu0 0
        %518 = vmatprep.subr.bf16.mxu0 0
        %519 = vmatpush1.bf16.msra.mxu0 0
        %520 = vmatprep.subr.bf16.mxu0 0
        %521 = vmatpush1.bf16.msra.mxu0 0
        %522 = vmatprep.subr.bf16.mxu0 0
        %523 = vmatpush1.bf16.msra.mxu0 0
        %524 = vmatprep.subr.bf16.mxu0 0
        %525 = vmatpush1.bf16.msra.mxu0 0
        %526 = vmatprep.subr.bf16.mxu0 0
        %527 = vmatpush1.bf16.msra.mxu0 0
        %528 = vmatprep.subr.bf16.mxu0 0
        %529 = vmatpush1.bf16.msra.mxu0 0
        %530 = vmatprep.subr.bf16.mxu0 0
        %531 = vmatpush1.bf16.msra.mxu0 0
        %532 = vmatprep.subr.bf16.mxu0 0
        %533 = vmatpush1.bf16.msra.mxu0 0
        %534 = vmatprep.subr.bf16.mxu0 0
        %535 = vmatpush1.bf16.msra.mxu0 0
        %536 = vmatprep.subr.bf16.mxu0 0
        %537 = vmatpush1.bf16.msra.mxu0 0
        %538 = vmatprep.mubr.bf16.mxu0 0
        %539 = vmatmul.mubr.bf16.gmra.mrb[0].mxu0 %v504
        %v540 = vpop.f32.mrb[0].mxu0
        %v541 = vadd.f32 %v489, %v540
        %v542 = vpop.f32.mrb[0].mxu0
        %v543 = vpop.f32.mrb[0].mxu0
        %v544 = vpop.f32.mrb[0].mxu0
        %545 = vdwg.mxu0
        %v546 = vld [vmem:[%s8] sm:$0xf]
        %v547 = vld [vmem:[%s8 + $0x4] sm:$0xf]
        %v548 = vld [vmem:[%s8 + $0x8] sm:$0xf]
        %v549 = vld [vmem:[%s8 + $0xc] sm:$0xf]
        %v550 = vld [vmem:[%s9] sm:$0x1]
        %v552 = vlaneseq
        %v553 = vshrl.u32 %v552, 7
        %v554 = vsub.s32 0, %v553
        %v555 = vrot.slane %v550, %v554
        %v561 = vunpack.c.l.b16 %v546
        %v562 = vunpack.c.l.b16 %v547
        %v563 = vunpack.c.l.b16 %v548
        %v564 = vunpack.c.l.b16 %v549
        %v565 = vpack.c.b16 %v562, %v561
        %v566 = vpack.c.b16 %v564, %v563
        %v570 = vsel %vm436, %v412, 0
        %572 = vmatprep.subr.bf16.mxu0 0
        %573 = vmatpush1.bf16.msra.mxu0 %v565
        %574 = vmatprep.subr.bf16.mxu0 0
        %575 = vmatpush1.bf16.msra.mxu0 %v566
        %576 = vmatprep.subr.bf16.mxu0 0
        %577 = vmatpush1.bf16.msra.mxu0 0
        %578 = vmatprep.subr.bf16.mxu0 0
        %579 = vmatpush1.bf16.msra.mxu0 0
        %580 = vmatprep.subr.bf16.mxu0 0
        %581 = vmatpush1.bf16.msra.mxu0 0
        %582 = vmatprep.subr.bf16.mxu0 0
        %583 = vmatpush1.bf16.msra.mxu0 0
        %584 = vmatprep.subr.bf16.mxu0 0
        %585 = vmatpush1.bf16.msra.mxu0 0
        %586 = vmatprep.subr.bf16.mxu0 0
        %587 = vmatpush1.bf16.msra.mxu0 0
        %588 = vmatprep.subr.bf16.mxu0 0
        %589 = vmatpush1.bf16.msra.mxu0 0
        %590 = vmatprep.subr.bf16.mxu0 0
        %591 = vmatpush1.bf16.msra.mxu0 0
        %592 = vmatprep.subr.bf16.mxu0 0
        %593 = vmatpush1.bf16.msra.mxu0 0
        %594 = vmatprep.subr.bf16.mxu0 0
        %595 = vmatpush1.bf16.msra.mxu0 0
        %596 = vmatprep.subr.bf16.mxu0 0
        %597 = vmatpush1.bf16.msra.mxu0 0
        %598 = vmatprep.subr.bf16.mxu0 0
        %599 = vmatpush1.bf16.msra.mxu0 0
        %600 = vmatprep.subr.bf16.mxu0 0
        %601 = vmatpush1.bf16.msra.mxu0 0
        %602 = vmatprep.subr.bf16.mxu0 0
        %603 = vmatpush1.bf16.msra.mxu0 0
        %604 = vmatprep.mubr.bf16.mxu0 0
        %605 = vmatmul.mubr.bf16.gmra.mrb[0].mxu0 %v570
        %v606 = vpop.f32.mrb[0].mxu0
        %v607 = vadd.f32 %v555, %v606
        %v608 = vpop.f32.mrb[0].mxu0
        %v609 = vpop.f32.mrb[0].mxu0
        %v610 = vpop.f32.mrb[0].mxu0
        %611 = vdwg.mxu0
        %v612 = vpack.c.bf16 %v475, %v475
        %v613 = vpack.c.bf16 %v541, %v541
        %vm614 = vcmask 64512
        %v616 = vsel %vm614, %v612, 0
        %v619 = vsel %vm614, %v613, 0
        %621 = vmatprep.subr.bf16.mxu0 0
        %622 = vmatpush1.bf16.xpose.msra.mxu0 %v619
        %623 = vmatprep.subr.bf16.mxu0 0
        %624 = vmatpush1.bf16.xpose.msra.mxu0 0
        %625 = vmatprep.subr.bf16.mxu0 0
        %626 = vmatpush1.bf16.xpose.msra.mxu0 0
        %627 = vmatprep.subr.bf16.mxu0 0
        %628 = vmatpush1.bf16.xpose.msra.mxu0 0
        %629 = vmatprep.subr.bf16.mxu0 0
        %630 = vmatpush1.bf16.xpose.msra.mxu0 0
        %631 = vmatprep.subr.bf16.mxu0 0
        %632 = vmatpush1.bf16.xpose.msra.mxu0 0
        %633 = vmatprep.subr.bf16.mxu0 0
        %634 = vmatpush1.bf16.xpose.msra.mxu0 0
        %635 = vmatprep.subr.bf16.mxu0 0
        %636 = vmatpush1.bf16.xpose.msra.mxu0 0
        %637 = vmatprep.subr.bf16.mxu0 0
        %638 = vmatpush1.bf16.xpose.msra.mxu0 0
        %639 = vmatprep.subr.bf16.mxu0 0
        %640 = vmatpush1.bf16.xpose.msra.mxu0 0
        %641 = vmatprep.subr.bf16.mxu0 0
        %642 = vmatpush1.bf16.xpose.msra.mxu0 0
        %643 = vmatprep.subr.bf16.mxu0 0
        %644 = vmatpush1.bf16.xpose.msra.mxu0 0
        %645 = vmatprep.subr.bf16.mxu0 0
        %646 = vmatpush1.bf16.xpose.msra.mxu0 0
        %647 = vmatprep.subr.bf16.mxu0 0
        %648 = vmatpush1.bf16.xpose.msra.mxu0 0
        %649 = vmatprep.subr.bf16.mxu0 0
        %650 = vmatpush1.bf16.xpose.msra.mxu0 0
        %651 = vmatprep.subr.bf16.mxu0 0
        %652 = vmatpush1.bf16.xpose.msra.mxu0 0
        %653 = vmatprep.mubr.bf16.mxu0 0
        %654 = vmatmul.mubr.bf16.gmra.mrb[0].mxu0 %v616
        %v655 = vpop.f32.mrb[0].mxu0
        %v656 = vadd.f32 0.0, %v655
        %v657 = vpop.f32.mrb[0].mxu0
        %v658 = vpop.f32.mrb[0].mxu0
        %v659 = vpop.f32.mrb[0].mxu0
        %660 = vdwg.mxu0
        %v661 = vld [vmem:[%s405] sm:$0xff]
        %vm662 = vcmp.eq.s32.totalorder %v661, 0
        %v663 = vsel %vm662, -inf, %v656
        %v664 = vsel %vm614, %v663, -inf
        %665 = vmax.xlane.f32.xlu0 %v664
        %v666 = vpop.xlane.xlu0 %665
        %v667 = vsub.f32 %v663, %v666
        %v668 = vmul.f32 %v667, 1.442695
        %v669 = vpow.pop %v668
        %v670 = vsel %vm614, %v669, 0.0
        %671 = vadd.xlane.f32.xlu0 %v670
        %v672 = vpop.xlane.xlu0 %671
        %v673 = vrcp.pop %v672
        %v674 = vmul.f32 %v669, %v673
        %v675 = vpack.c.bf16 %v674, %v674
        %v676 = vpack.c.bf16 %v607, %v607
        %v678 = vsel %vm614, %v675, 0
        %vm680 = vcmask 1043456
        %v682 = vsel %vm680, %v676, 0
        %684 = vmatprep.subr.bf16.mxu0 0
        %685 = vmatpush1.bf16.msra.mxu0 %v682
        %686 = vmatprep.subr.bf16.mxu0 0
        %687 = vmatpush1.bf16.msra.mxu0 0
        %688 = vmatprep.subr.bf16.mxu0 0
        %689 = vmatpush1.bf16.msra.mxu0 0
        %690 = vmatprep.subr.bf16.mxu0 0
        %691 = vmatpush1.bf16.msra.mxu0 0
        %692 = vmatprep.subr.bf16.mxu0 0
        %693 = vmatpush1.bf16.msra.mxu0 0
        %694 = vmatprep.subr.bf16.mxu0 0
        %695 = vmatpush1.bf16.msra.mxu0 0
        %696 = vmatprep.subr.bf16.mxu0 0
        %697 = vmatpush1.bf16.msra.mxu0 0
        %698 = vmatprep.subr.bf16.mxu0 0
        %699 = vmatpush1.bf16.msra.mxu0 0
        %700 = vmatprep.subr.bf16.mxu0 0
        %701 = vmatpush1.bf16.msra.mxu0 0
        %702 = vmatprep.subr.bf16.mxu0 0
        %703 = vmatpush1.bf16.msra.mxu0 0
        %704 = vmatprep.subr.bf16.mxu0 0
        %705 = vmatpush1.bf16.msra.mxu0 0
        %706 = vmatprep.subr.bf16.mxu0 0
        %707 = vmatpush1.bf16.msra.mxu0 0
        %708 = vmatprep.subr.bf16.mxu0 0
        %709 = vmatpush1.bf16.msra.mxu0 0
        %710 = vmatprep.subr.bf16.mxu0 0
        %711 = vmatpush1.bf16.msra.mxu0 0
        %712 = vmatprep.subr.bf16.mxu0 0
        %713 = vmatpush1.bf16.msra.mxu0 0
        %714 = vmatprep.subr.bf16.mxu0 0
        %715 = vmatpush1.bf16.msra.mxu0 0
        %716 = vmatprep.mubr.bf16.mxu0 0
        %717 = vmatmul.mubr.bf16.gmra.mrb[0].mxu0 %v678
        %v718 = vpop.f32.mrb[0].mxu0
        %v719 = vadd.f32 0.0, %v718
        %v720 = vpop.f32.mrb[0].mxu0
        %v721 = vpop.f32.mrb[0].mxu0
        %v722 = vpop.f32.mrb[0].mxu0
        %723 = vdwg.mxu0
        %724 = vst.msk [vmem:[%s389] sm:$0xff] %vm614, %v719
        %s725 = sand.u32 %s262, 1
        %s726 = scalar_lea.sflag [#allocation3], %s725
        %s727 = sand.u32 %s262, 1
        %s728 = smul.addr %s727, 8
        %s729 = scalar_lea.vmem [#allocation2], %s728
        // Predicated region
        $region61: #{tpu_custom_call.1} parent=59 // pred_check
          %p730 = pneg %p272
        $region62: #{tpu_custom_call.1} parent=59 // pred_check_branch
          %732 = sbr.rel (%p730) target = $region64
        $region63: #{tpu_custom_call.1} parent=59 // pred_region
          %s734 = ssub.s32 128, 128
          %735 = vsyncadd %s726, %s734
          %s736 = smul.addr %s24, 128
          %s737 = scalar_lea.hbm %s10, %s736
          %s739 = sshll.u32 %s729, 4
          %s740 = int_to_ptr.vmem [resolvable:$true] %s739
          %742 = dma.vmem_to_hbm [thread:$0]  %s740, 128, %s737, %s726
        $region64: #{tpu_custom_call.1} parent=59 // pred_fallthru
          _
      $region60: #{tpu_custom_call.1} parent=5 // pred_fallthru
        _
      %p743 = scmp.le.s32.totalorder 2, %s19
      // Predicated region
      $region65: #{tpu_custom_call.1} parent=5 // pred_check
        %p744 = pneg %p743
      $region66: #{tpu_custom_call.1} parent=5 // pred_check_branch
        %746 = sbr.rel (%p744) target = $region68
      $region67: #{tpu_custom_call.1} parent=5 // pred_region
        %s747 = ssub.s32 %s19, 2
        // Predicated region
        $region69: #{tpu_custom_call.1} parent=67 // pred_check
          %p748 = pneg %p278
        $region70: #{tpu_custom_call.1} parent=67 // pred_check_branch
          %750 = sbr.rel (%p748) target = $region72
        $region71: #{tpu_custom_call.1} parent=67 // pred_region
          %s751 = sand.u32 %s263, 1
          %s752 = scalar_lea.sflag [#allocation3], %s751
          %s753 = sand.u32 %s263, 1
          %s754 = smul.addr %s753, 8
          %s755 = scalar_lea.vmem [#allocation2], %s754
          %756 = dma.done %s752, 128
        $region72: #{tpu_custom_call.1} parent=67 // pred_fallthru
          _
      $region68: #{tpu_custom_call.1} parent=5 // pred_fallthru
        _
    $region6: #{tpu_custom_call.1} parent=1 // loop_footer
      %s23 = sadd.s32 1, %s19
    $region7: #{tpu_custom_call.1} parent=1 // loop_footer_branch
      %18 = sbr.rel target = $region3
    $region8: #{tpu_custom_call.1} parent=1 // loop_exit
      _
    %757 = vsyncpa [#allocation3], 1
    %s758 = scalar_lea.sflag [#allocation3], 1
    %759 = vsyncpa %s758, 1

</llo_original>
